<compile_context>
chip_gen: v5e
topology: v5e:2x2
jax: 0.10.0
libtpu: 0.0.40
codegen_flags: <defaults>
</compile_context>

<pallas_src>
import functools

import jax
import jax.numpy as jnp
from jax.experimental import pallas as pl
from jax.experimental.pallas import tpu as pltpu

IN_DIM = 2
HID_DIM = 50
HID_PAD = 64      # hidden padded to a sublane multiple (8); padding is exact
OUT_DIM = 2

# Row offsets inside the packed parameter slab (shape (_SLAB_ROWS, HID_PAD)).
_R_W1T = 0          # rows 0:2    -> w1^T (2, 64)
_R_B1 = 2           # row  2      -> b1   (1, 64)
_R_B2 = 3           # row  3      -> b2   (1, 64)
_R_B3 = 4           # row  4      -> b3   (1, 2)  in cols 0:2
_R_W2T = 8          # rows 8:72   -> w2^T (64, 64)   (8-row aligned)
_R_W3T = 72         # rows 72:136 -> w3^T (64, 2)    (8-row aligned), cols 0:2
_SLAB_ROWS = 136


def mlp_kernel(x_ref, p_ref, o_ref):
    """One batch tile: (TB, 2) -> (TB, 2), natural layout, no transposes."""
    x = x_ref[...]                                        # (TB, 2) f32

    # ---- Layer 1: K=2 contraction on the VPU (two broadcast FMAs), skip MXU.
    w1t = p_ref[_R_W1T:_R_W1T + IN_DIM, :]                # (2, 64)
    b1 = p_ref[_R_B1:_R_B1 + 1, :]                        # (1, 64)
    h1 = x[:, 0:1] * w1t[0:1, :] + x[:, 1:2] * w1t[1:2, :] + b1
    h1 = jnp.maximum(h1, 0.0)                             # (TB, 64)

    # ---- Layer 2: (TB,64) @ (64,64) on the MXU, f32 accumulation.
    w2t = p_ref[_R_W2T:_R_W2T + HID_PAD, :]               # (64, 64)
    b2 = p_ref[_R_B2:_R_B2 + 1, :]                        # (1, 64)
    h2 = jnp.dot(h1, w2t, preferred_element_type=jnp.float32) + b2
    h2 = jnp.maximum(h2, 0.0)                             # (TB, 64)

    # ---- Layer 3: (TB,64) @ (64,2) on the MXU.
    w3t = p_ref[_R_W3T:_R_W3T + HID_PAD, 0:OUT_DIM]       # (64, 2)
    b3 = p_ref[_R_B3:_R_B3 + 1, 0:OUT_DIM]                # (1, 2)
    o = jnp.dot(h2, w3t, preferred_element_type=jnp.float32) + b3
    o_ref[...] = o.astype(o_ref.dtype)                    # (TB, 2)


def prepare_params(params):
    """One-time packing of PyTorch-layout params into a single resident slab.

    params: dict with w1 (50,2), b1 (50,), w2 (50,50), b2 (50,), w3 (2,50), b3 (2,)
    Returns a (136, 64) f32 slab.  Hidden padding 50->64 is exact (zeros).
    """
    w1 = jnp.asarray(params["w1"], jnp.float32)
    b1 = jnp.asarray(params["b1"], jnp.float32)
    w2 = jnp.asarray(params["w2"], jnp.float32)
    b2 = jnp.asarray(params["b2"], jnp.float32)
    w3 = jnp.asarray(params["w3"], jnp.float32)
    b3 = jnp.asarray(params["b3"], jnp.float32)

    slab = jnp.zeros((_SLAB_ROWS, HID_PAD), jnp.float32)
    slab = slab.at[_R_W1T:_R_W1T + IN_DIM, :HID_DIM].set(w1.T)          # (2,50)
    slab = slab.at[_R_B1, :HID_DIM].set(b1)
    slab = slab.at[_R_B2, :HID_DIM].set(b2)
    slab = slab.at[_R_B3, :OUT_DIM].set(b3)
    slab = slab.at[_R_W2T:_R_W2T + HID_DIM, :HID_DIM].set(w2.T)         # (50,50)
    slab = slab.at[_R_W3T:_R_W3T + HID_DIM, :OUT_DIM].set(w3.T)         # (50,2)
    return slab


def _pick_tile(n, tb_max):
    """Batch tile: multiple of 8 (batch is on sublanes), capped so the grid has
    >= 2 steps whenever possible (engages v7x's second TensorCore)."""
    tb_max = max(8, (int(tb_max) // 8) * 8)
    half = -(-int(n) // 2)                 # cdiv(n, 2)
    half = max(8, -(-half // 8) * 8)       # round up to sublane multiple
    return min(tb_max, half)


@functools.partial(jax.jit, static_argnames=("tb_max",))
def prediction_machine_forward(x, param_slab, *, tb_max=2048):
    """x: (N, 2) float32 -> (N, 2) float32.  param_slab from prepare_params()."""
    x = jnp.asarray(x, jnp.float32)
    n = x.shape[0]
    tb = _pick_tile(n, tb_max)
    grid = pl.cdiv(n, tb)
    n_pad = grid * tb

    # Zero-pad the batch only when needed (exact: padded rows are sliced off).
    x_in = x if n_pad == n else jnp.zeros((n_pad, IN_DIM), jnp.float32).at[:n, :].set(x)

    out = pl.pallas_call(
        mlp_kernel,
        out_shape=jax.ShapeDtypeStruct((n_pad, OUT_DIM), jnp.float32),
        grid_spec=pltpu.PrefetchScalarGridSpec(
            num_scalar_prefetch=0,
            grid=(grid,),
            in_specs=[
                pl.BlockSpec((tb, IN_DIM), lambda i: (i, 0)),          # x tile
                pl.BlockSpec((_SLAB_ROWS, HID_PAD), lambda i: (0, 0)),  # resident params
            ],
            out_specs=pl.BlockSpec((tb, OUT_DIM), lambda i: (i, 0)),
        ),
        compiler_params=pltpu.CompilerParams(
            dimension_semantics=("parallel",),     # shards grid across v7x's 2 TCs
            vmem_limit_bytes=32 << 20,             # far above actual use; safe on all gens
        ),
    )(x_in, param_slab)

    return out if n_pad == n else out[:n]


def init_params(key):
    """nn.Linear-style init, PyTorch layout: weight (out, in), bias (out,)."""
    ks = jax.random.split(key, 6)

    def linear(kw, kb, fan_in, fan_out):
        bound = 1.0 / jnp.sqrt(float(fan_in))
        w = jax.random.uniform(kw, (fan_out, fan_in), jnp.float32, -bound, bound)
        b = jax.random.uniform(kb, (fan_out,), jnp.float32, -bound, bound)
        return w, b

    w1, b1 = linear(ks[0], ks[1], IN_DIM, HID_DIM)
    w2, b2 = linear(ks[2], ks[3], HID_DIM, HID_DIM)
    w3, b3 = linear(ks[4], ks[5], HID_DIM, OUT_DIM)
    return {"w1": w1, "b1": b1, "w2": w2, "b2": b2, "w3": w3, "b3": b3}


def reference_forward(x, p):
    hi = jax.lax.Precision.HIGHEST
    h1 = jnp.maximum(jnp.dot(x, p["w1"].T, precision=hi) + p["b1"], 0.0)
    h2 = jnp.maximum(jnp.dot(h1, p["w2"].T, precision=hi) + p["b2"], 0.0)
    return jnp.dot(h2, p["w3"].T, precision=hi) + p["b3"]


if __name__ == "__main__":
    key = jax.random.PRNGKey(0)
    k_params, k_x = jax.random.split(key)
    params = init_params(k_params)

    # One-time parameter packing (hoisted out of the per-call path).
    param_slab = jax.block_until_ready(prepare_params(params))

    N = 16  # small example batch; arbitrary N is supported (padded internally)
    x = jax.random.normal(k_x, (N, IN_DIM), jnp.float32)

    out = prediction_machine_forward(x, param_slab)
    out = jax.block_until_ready(out)

    ref = reference_forward(x, params)
    assert out.shape == (N, OUT_DIM)
    assert jnp.allclose(out, ref, atol=1e-4, rtol=1e-4), "mismatch vs JAX reference"

    print("KERNEL_OK")
</pallas_src>

<mosaic_0001>
module attributes {stable_mosaic.version = 11 : i64} {
  func.func @mlp_kernel(%arg0: i32, %arg1: memref<8x2xf32, #tpu.memory_space<vmem>>, %arg2: memref<136x64xf32, #tpu.memory_space<vmem>>, %arg3: memref<8x2xf32, #tpu.memory_space<vmem>>) attributes {dimension_semantics = [#tpu.dimension_semantics<parallel>], iteration_bounds = array<i64: 2>, scalar_prefetch = 0 : i64, scratch_operands = 0 : i64, tpu.core_type = #tpu.core_type<tc>, window_params = [{transform_indices = @transform_0, window_bounds = array<i64: 8, 2>}, {pipeline_mode = #tpu.pipeline_mode<synchronous>, transform_indices = @transform_1, window_bounds = array<i64: 136, 64>}, {transform_indices = @transform_2, window_bounds = array<i64: 8, 2>}]} {
    %c0 = arith.constant 0 : index
    %c0_0 = arith.constant 0 : index
    %0 = vector.load %arg1[%c0, %c0_0] : memref<8x2xf32, #tpu.memory_space<vmem>>, vector<8x2xf32>
    %c0_1 = arith.constant 0 : index
    %c0_2 = arith.constant 0 : index
    %1 = vector.load %arg2[%c0_1, %c0_2] : memref<136x64xf32, #tpu.memory_space<vmem>>, vector<2x64xf32>
    %c2 = arith.constant 2 : index
    %c0_3 = arith.constant 0 : index
    %2 = vector.load %arg2[%c2, %c0_3] : memref<136x64xf32, #tpu.memory_space<vmem>>, vector<1x64xf32>
    %3 = vector.extract_strided_slice %0 {offsets = [0, 0], sizes = [8, 1], strides = [1, 1]} : vector<8x2xf32> to vector<8x1xf32>
    %4 = vector.extract_strided_slice %1 {offsets = [0, 0], sizes = [1, 64], strides = [1, 1]} : vector<2x64xf32> to vector<1x64xf32>
    %5 = vector.broadcast %3 : vector<8x1xf32> to vector<8x64xf32>
    %6 = vector.broadcast %4 : vector<1x64xf32> to vector<8x64xf32>
    %7 = arith.mulf %5, %6 : vector<8x64xf32>
    %8 = vector.extract_strided_slice %0 {offsets = [0, 1], sizes = [8, 1], strides = [1, 1]} : vector<8x2xf32> to vector<8x1xf32>
    %9 = vector.extract_strided_slice %1 {offsets = [1, 0], sizes = [1, 64], strides = [1, 1]} : vector<2x64xf32> to vector<1x64xf32>
    %10 = vector.broadcast %8 : vector<8x1xf32> to vector<8x64xf32>
    %11 = vector.broadcast %9 : vector<1x64xf32> to vector<8x64xf32>
    %12 = arith.mulf %10, %11 : vector<8x64xf32>
    %13 = arith.addf %7, %12 : vector<8x64xf32>
    %14 = vector.broadcast %2 : vector<1x64xf32> to vector<8x64xf32>
    %15 = arith.addf %13, %14 : vector<8x64xf32>
    %cst = arith.constant 0.000000e+00 : f32
    %16 = vector.broadcast %cst : f32 to vector<8x64xf32>
    %17 = arith.maximumf %15, %16 : vector<8x64xf32>
    %c8 = arith.constant 8 : index
    %c0_4 = arith.constant 0 : index
    %18 = vector.load %arg2[%c8, %c0_4] : memref<136x64xf32, #tpu.memory_space<vmem>>, vector<64x64xf32>
    %c3 = arith.constant 3 : index
    %c0_5 = arith.constant 0 : index
    %19 = vector.load %arg2[%c3, %c0_5] : memref<136x64xf32, #tpu.memory_space<vmem>>, vector<1x64xf32>
    %cst_6 = arith.constant dense<0.000000e+00> : vector<8x64xf32>
    %20 = tpu.matmul %17, %18, %cst_6 {dimension_numbers = #tpu.dot_dimension_numbers<[1], [0], [0], [1], [0, 0, 1, 1], [], []>} : vector<8x64xf32>, vector<64x64xf32>, vector<8x64xf32> -> vector<8x64xf32>
    %21 = vector.broadcast %19 : vector<1x64xf32> to vector<8x64xf32>
    %22 = arith.addf %20, %21 : vector<8x64xf32>
    %cst_7 = arith.constant 0.000000e+00 : f32
    %23 = vector.broadcast %cst_7 : f32 to vector<8x64xf32>
    %24 = arith.maximumf %22, %23 : vector<8x64xf32>
    %c72 = arith.constant 72 : index
    %c0_8 = arith.constant 0 : index
    %25 = vector.load %arg2[%c72, %c0_8] : memref<136x64xf32, #tpu.memory_space<vmem>>, vector<64x2xf32>
    %c4 = arith.constant 4 : index
    %c0_9 = arith.constant 0 : index
    %26 = vector.load %arg2[%c4, %c0_9] : memref<136x64xf32, #tpu.memory_space<vmem>>, vector<1x2xf32>
    %cst_10 = arith.constant dense<0.000000e+00> : vector<8x2xf32>
    %27 = tpu.matmul %24, %25, %cst_10 {dimension_numbers = #tpu.dot_dimension_numbers<[1], [0], [0], [1], [0, 0, 1, 1], [], []>} : vector<8x64xf32>, vector<64x2xf32>, vector<8x2xf32> -> vector<8x2xf32>
    %28 = vector.broadcast %26 : vector<1x2xf32> to vector<8x2xf32>
    %29 = arith.addf %27, %28 : vector<8x2xf32>
    %c0_11 = arith.constant 0 : index
    %c0_12 = arith.constant 0 : index
    %30 = vector.load %arg3[%c0_11, %c0_12] : memref<8x2xf32, #tpu.memory_space<vmem>>, vector<8x2xf32>
    tpu.vector_store %arg3[%c0_11, %c0_12], %29 {strides = array<i32>} : memref<8x2xf32, #tpu.memory_space<vmem>>, vector<8x2xf32>,
    return
  }
  func.func @transform_0(%arg0: i32) -> (i32, i32) {
    %c0_i32 = arith.constant 0 : i32
    %c0_i32_0 = arith.constant 0 : i32
    return %arg0, %c0_i32 : i32, i32
  }
  func.func @transform_1(%arg0: i32) -> (i32, i32) {
    %c0_i32 = arith.constant 0 : i32
    %c0_i32_0 = arith.constant 0 : i32
    %c0_i32_1 = arith.constant 0 : i32
    return %c0_i32, %c0_i32_0 : i32, i32
  }
  func.func @transform_2(%arg0: i32) -> (i32, i32) {
    %c0_i32 = arith.constant 0 : i32
    %c0_i32_0 = arith.constant 0 : i32
    return %arg0, %c0_i32 : i32, i32
  }
}

</mosaic_0001>

<llo_original>
// kernel: prediction_machine_forward.1
$region0: #{prediction_machine_forward.1}
  #allocation0 [shape = 'u32[]', space=smem, size = 0x4, offset = 0x4, fixed_abs, tag = 'smem constant byte address 0x4 - core index']
  #allocation1 [shape = 'u32[72,128]{1,0:T(1,128)}', space=vmem, size = 0x9000, scoped, tag = 'internal scratch']
  %s0 = inlined_call_operand.vmem [shape: f32[16,2], index: 0, kind: input, shape index: {}]
  %s1 = inlined_call_operand.vmem [shape: f32[136,64], index: 1, kind: input, shape index: {}]
  %s2 = inlined_call_operand.vmem [shape: f32[16,2], index: 2, kind: output, shape index: {}]
  %s3 = sld [smem:[#allocation0]]
  $region41: #{prediction_machine_forward.1} parent=0
    _
  %s5 = ssub.s32 1, %s3
  %s6 = scalar_select 0, %s5, %s3
  loop: start=0, step=1, limit=4
  $region2: #{prediction_machine_forward.1} parent=0 // loop_pre_header
    _
  $region3: #{prediction_machine_forward.1} parent=0 // loop_header
    %s8 = sphi 0, %s12
    %p9 = scmp.ge.s32.totalorder %s8, 4
    %s18 = sphi 0, %s20
    %s21 = sphi 0, %s18
    %s22 = sphi 0, %s21
    %s38 = sphi 0, %s22
    %s42 = sphi 0, %s42
    %s44 = sphi 0, %s42
    %s45 = sphi 0, %s44
    %s59 = sphi 0, %s45
    %s65 = sphi 0, %s67
    %s68 = sphi 0, %s65
    %s69 = sphi 0, %s68
    %s85 = sphi 0, %s69
  $region4: #{prediction_machine_forward.1} parent=0 // loop_header_branch
    %11 = sbr.rel (%p9) target = $region8
  $region5: #{prediction_machine_forward.1} parent=0 // loop_body
    %s13 = ssub.s32 %s8, 1
    %s14 = ssub.s32 %s8, 2
    %s15 = sadd.s32 %s8, 1
    %s16 = ssub.s32 %s8, %s15
    %p17 = scmp.eq.s32.totalorder %s16, 0
    %s19 = sadd.s32 %s18, 1
    %s20 = scalar_select %p17, %s18, %s19
    %p23 = pneg %p17
    %p24 = scmp.eq.s32.totalorder %s8, 1
    %p25 = por %p23, %p24
    %p26 = scmp.ne.s32.totalorder %s18, %s21
    %p27 = scmp.eq.s32.totalorder %s8, 0
    %p28 = por %p26, %p27
    %p29 = scmp.ne.s32.totalorder %s18, %s21
    %p30 = scmp.eq.s32.totalorder %s13, 1
    %p31 = por %p29, %p30
    %p32 = scmp.ne.s32.totalorder %s21, %s22
    %p33 = scmp.eq.s32.totalorder %s13, 0
    %p34 = por %p32, %p33
    %p35 = scmp.ne.s32.totalorder %s21, %s22
    %p36 = scmp.eq.s32.totalorder %s14, 1
    %p37 = por %p35, %p36
    %p39 = scmp.ne.s32.totalorder %s22, %s38
    %p40 = scmp.eq.s32.totalorder %s14, 0
    %p41 = por %p39, %p40
    %s43 = sadd.s32 %s42, 1
    %p46 = scmp.eq.s32.totalorder %s8, 1
    %p47 = scmp.ne.s32.totalorder %s42, %s44
    %p48 = scmp.eq.s32.totalorder %s8, 0
    %p49 = por %p47, %p48
    %p50 = scmp.ne.s32.totalorder %s42, %s44
    %p51 = scmp.eq.s32.totalorder %s13, 1
    %p52 = por %p50, %p51
    %p53 = scmp.ne.s32.totalorder %s44, %s45
    %p54 = scmp.eq.s32.totalorder %s13, 0
    %p55 = por %p53, %p54
    %p56 = scmp.ne.s32.totalorder %s44, %s45
    %p57 = scmp.eq.s32.totalorder %s14, 1
    %p58 = por %p56, %p57
    %p60 = scmp.ne.s32.totalorder %s45, %s59
    %p61 = scmp.eq.s32.totalorder %s14, 0
    %p62 = por %p60, %p61
    %s63 = ssub.s32 %s8, %s15
    %p64 = scmp.eq.s32.totalorder %s63, 0
    %s66 = sadd.s32 %s65, 1
    %s67 = scalar_select %p64, %s65, %s66
    %p70 = pneg %p64
    %p71 = scmp.eq.s32.totalorder %s8, 1
    %p72 = por %p70, %p71
    %p73 = scmp.ne.s32.totalorder %s65, %s68
    %p74 = scmp.eq.s32.totalorder %s8, 0
    %p75 = por %p73, %p74
    %p76 = scmp.ne.s32.totalorder %s65, %s68
    %p77 = scmp.eq.s32.totalorder %s13, 1
    %p78 = por %p76, %p77
    %p79 = scmp.ne.s32.totalorder %s68, %s69
    %p80 = scmp.eq.s32.totalorder %s13, 0
    %p81 = por %p79, %p80
    %p82 = scmp.ne.s32.totalorder %s68, %s69
    %p83 = scmp.eq.s32.totalorder %s14, 1
    %p84 = por %p82, %p83
    %p86 = scmp.ne.s32.totalorder %s69, %s85
    %p87 = scmp.eq.s32.totalorder %s14, 0
    %p88 = por %p86, %p87
    %p89 = scmp.le.s32.totalorder 1, %s8
    %p90 = scmp.lt.s32.totalorder %s8, 3
    %p91 = pnand %p89, %p90
    %p92 = pneg %p91
    // Predicated region
    $region9: #{prediction_machine_forward.1} parent=5 // pred_check
      _
    $region10: #{prediction_machine_forward.1} parent=5 // pred_check_branch
      %94 = sbr.rel (%p91) target = $region12
    $region11: #{prediction_machine_forward.1} parent=5 // pred_region
      %s95 = ssub.s32 %s8, 1
      // Predicated region
      $region13: #{prediction_machine_forward.1} parent=11 // pred_check
        %p96 = pneg %p55
      $region14: #{prediction_machine_forward.1} parent=11 // pred_check_branch
        %98 = sbr.rel (%p96) target = $region16
      $region15: #{prediction_machine_forward.1} parent=11 // pred_region
        _
      $region16: #{prediction_machine_forward.1} parent=11 // pred_fallthru
        _
    $region12: #{prediction_machine_forward.1} parent=5 // pred_fallthru
      _
    %p99 = scmp.lt.s32.totalorder %s8, 2
    // Predicated region
    $region17: #{prediction_machine_forward.1} parent=5 // pred_check
      %p100 = pneg %p99
    $region18: #{prediction_machine_forward.1} parent=5 // pred_check_branch
      %102 = sbr.rel (%p100) target = $region20
    $region19: #{prediction_machine_forward.1} parent=5 // pred_region
      // Predicated region
      $region21: #{prediction_machine_forward.1} parent=19 // pred_check
        %p103 = pneg %p28
      $region22: #{prediction_machine_forward.1} parent=19 // pred_check_branch
        %105 = sbr.rel (%p103) target = $region24
      $region23: #{prediction_machine_forward.1} parent=19 // pred_region
        %p106 = scmp.lt.s32.totalorder %s8, 1
        %s107 = scalar_select %p106, %s8, 1
        %s108 = smul.addr %s107, 8
        %s109 = scalar_lea.vmem %s0, %s108
      $region24: #{prediction_machine_forward.1} parent=19 // pred_fallthru
        _
    $region20: #{prediction_machine_forward.1} parent=5 // pred_fallthru
      _
    %p110 = scmp.le.s32.totalorder 1, %s8
    %p111 = scmp.lt.s32.totalorder %s8, 3
    %p112 = pnand %p110, %p111
    %p113 = pneg %p112
    // Predicated region
    $region25: #{prediction_machine_forward.1} parent=5 // pred_check
      _
    $region26: #{prediction_machine_forward.1} parent=5 // pred_check_branch
      %115 = sbr.rel (%p112) target = $region28
    $region27: #{prediction_machine_forward.1} parent=5 // pred_region
      %s116 = ssub.s32 %s8, 1
      %p117 = scmp.lt.s32.totalorder %s13, 1
      %s118 = scalar_select %p117, %s13, 1
      %s119 = smul.addr %s118, 8
      %s120 = scalar_lea.vmem %s0, %s119
      %p121 = pneg %p34
      %p122 = pneg %p31
      %p123 = pneg %p55
      %p124 = pneg %p52
      %p125 = pneg %p81
      %p126 = pneg %p78
      %p127 = scmp.lt.s32.totalorder %s13, 1
      %s128 = scalar_select %p127, %s13, 1
      %s129 = smul.addr %s128, 8
      %s130 = scalar_lea.vmem %s2, %s129
      %p131 = scmp.lt.s32.totalorder %s13, 1
      %s132 = scalar_select %p131, %s13, 1
      %s133 = smul.addr %s132, 8
      %s134 = scalar_lea.vmem %s0, %s133
      %p135 = scmp.lt.s32.totalorder %s13, 1
      %s136 = scalar_select %p135, %s13, 1
      %s137 = smul.addr %s136, 8
      %s138 = scalar_lea.vmem %s2, %s137
      %v139 = vld [vmem:[%s134] sm:$0xff]
      %v140 = vld [vmem:[%s1] sm:$0x3]
      %v141 = vld [vmem:[%s1 + $0x2] sm:$0x1]
      %143 = vset.pattern.permute.xlu0 0
      %144 = vperm.xlu0 %143, %v139
      %v145 = vpop.permute.xlu0 %144
      %v147 = vperm.slane %v140, 0
      %v148 = vmul.f32 %v145, %v147
      %149 = vset.pattern.permute.xlu0 1
      %150 = vperm.xlu0 %149, %v139
      %v151 = vpop.permute.xlu0 %150
      %v153 = vperm.slane %v140, 1
      %v154 = vmul.f32 %v151, %v153
      %v155 = vadd.f32 %v148, %v154
      %v156 = vperm.slane %v141, 0
      %v157 = vadd.f32 %v155, %v156
      %v158 = vmax.f32 %v157, 0.0
      %v159 = vld [vmem:[%s1 + $0x8] sm:$0xff]
      %v160 = vld [vmem:[%s1 + $0x10] sm:$0xff]
      %v161 = vld [vmem:[%s1 + $0x18] sm:$0xff]
      %v162 = vld [vmem:[%s1 + $0x20] sm:$0xff]
      %v163 = vld [vmem:[%s1 + $0x28] sm:$0xff]
      %v164 = vld [vmem:[%s1 + $0x30] sm:$0xff]
      %v165 = vld [vmem:[%s1 + $0x38] sm:$0xff]
      %v166 = vld [vmem:[%s1 + $0x40] sm:$0xff]
      %v167 = vld [vmem:[%s1 + $0x3] sm:$0x1]
      %v168 = vperm.slane %v167, 0
      %vm169 = vcmask 523264
      %v171 = vsel %vm169, %v158, 0
      %173 = vmatpush.msra.mxu0 0.0
      %174 = vmatpush.msra.mxu0 0.0
      %175 = vmatpush.msra.mxu0 0.0
      %176 = vmatpush.msra.mxu0 0.0
      %177 = vmatpush.msra.mxu0 0.0
      %178 = vmatpush.msra.mxu0 0.0
      %179 = vmatpush.msra.mxu0 0.0
      %180 = vmatpush.msra.mxu0 0.0
      %181 = vmatpush.msra.mxu0 %v166
      %182 = vmatpush.msra.mxu0 %v165
      %183 = vmatpush.msra.mxu0 %v164
      %184 = vmatpush.msra.mxu0 %v163
      %185 = vmatpush.msra.mxu0 %v162
      %186 = vmatpush.msra.mxu0 %v161
      %187 = vmatpush.msra.mxu0 %v160
      %188 = vmatpush.msra.mxu0 %v159
      %189 = vmatmul.f32.gmra.mxu0 %v171
      %v190 = vpop.f32.mrf.mxu0
      %v191 = vadd.f32 %v168, %v190
      %192 = vdwg.mxu0
      %v193 = vmax.f32 %v191, 0.0
      %v194 = vld [vmem:[%s1 + $0x48] sm:$0xff]
      %v195 = vld [vmem:[%s1 + $0x50] sm:$0xff]
      %v196 = vld [vmem:[%s1 + $0x58] sm:$0xff]
      %v197 = vld [vmem:[%s1 + $0x60] sm:$0xff]
      %v198 = vld [vmem:[%s1 + $0x68] sm:$0xff]
      %v199 = vld [vmem:[%s1 + $0x70] sm:$0xff]
      %v200 = vld [vmem:[%s1 + $0x78] sm:$0xff]
      %v201 = vld [vmem:[%s1 + $0x80] sm:$0xff]
      %v202 = vld [vmem:[%s1 + $0x4] sm:$0x1]
      %v203 = vperm.slane %v202, 0
      %v205 = vsel %vm169, %v193, 0
      %207 = vmatpush.msra.mxu0 0.0
      %208 = vmatpush.msra.mxu0 0.0
      %209 = vmatpush.msra.mxu0 0.0
      %210 = vmatpush.msra.mxu0 0.0
      %211 = vmatpush.msra.mxu0 0.0
      %212 = vmatpush.msra.mxu0 0.0
      %213 = vmatpush.msra.mxu0 0.0
      %214 = vmatpush.msra.mxu0 0.0
      %215 = vmatpush.msra.mxu0 %v201
      %216 = vmatpush.msra.mxu0 %v200
      %217 = vmatpush.msra.mxu0 %v199
      %218 = vmatpush.msra.mxu0 %v198
      %219 = vmatpush.msra.mxu0 %v197
      %220 = vmatpush.msra.mxu0 %v196
      %221 = vmatpush.msra.mxu0 %v195
      %222 = vmatpush.msra.mxu0 %v194
      %223 = vmatmul.f32.gmra.mxu0 %v205
      %v224 = vpop.f32.mrf.mxu0
      %v225 = vadd.f32 %v203, %v224
      %226 = vdwg.mxu0
      %vm227 = vcmask 15360
      %228 = vst.msk [vmem:[%s138] sm:$0xff] %vm227, %v225
      %p229 = scmp.lt.s32.totalorder %s13, 1
      %s230 = scalar_select %p229, %s13, 1
      %s231 = smul.addr %s230, 8
      %s232 = scalar_lea.vmem %s2, %s231
      // Predicated region
      $region29: #{prediction_machine_forward.1} parent=27 // pred_check
        %p233 = pneg %p78
      $region30: #{prediction_machine_forward.1} parent=27 // pred_check_branch
        %235 = sbr.rel (%p233) target = $region32
      $region31: #{prediction_machine_forward.1} parent=27 // pred_region
        _
      $region32: #{prediction_machine_forward.1} parent=27 // pred_fallthru
        _
    $region28: #{prediction_machine_forward.1} parent=5 // pred_fallthru
      _
    %p236 = scmp.le.s32.totalorder 2, %s8
    // Predicated region
    $region33: #{prediction_machine_forward.1} parent=5 // pred_check
      %p237 = pneg %p236
    $region34: #{prediction_machine_forward.1} parent=5 // pred_check_branch
      %239 = sbr.rel (%p237) target = $region36
    $region35: #{prediction_machine_forward.1} parent=5 // pred_region
      %s240 = ssub.s32 %s8, 2
      // Predicated region
      $region37: #{prediction_machine_forward.1} parent=35 // pred_check
        %p241 = pneg %p84
      $region38: #{prediction_machine_forward.1} parent=35 // pred_check_branch
        %243 = sbr.rel (%p241) target = $region40
      $region39: #{prediction_machine_forward.1} parent=35 // pred_region
        %p244 = scmp.lt.s32.totalorder %s14, 1
        %s245 = scalar_select %p244, %s14, 1
        %s246 = smul.addr %s245, 8
        %s247 = scalar_lea.vmem %s2, %s246
      $region40: #{prediction_machine_forward.1} parent=35 // pred_fallthru
        _
    $region36: #{prediction_machine_forward.1} parent=5 // pred_fallthru
      _
  $region6: #{prediction_machine_forward.1} parent=0 // loop_footer
    %s12 = sadd.s32 1, %s8
  $region7: #{prediction_machine_forward.1} parent=0 // loop_footer_branch
    %7 = sbr.rel target = $region3
  $region8: #{prediction_machine_forward.1} parent=0 // loop_exit
    _

</llo_original>
